<compile_context>
chip_gen: v7x
topology: tpu7x:2x2x1
jax: 0.10.0
libtpu: 0.0.40
codegen_flags: <defaults>
</compile_context>

<pallas_src>
import functools

import jax
import jax.numpy as jnp
import numpy as np
from jax.experimental import pallas as pl
from jax.experimental.pallas import tpu as pltpu


def fused_kernel(x_ref, wf_ref, wfold_ref, w2_ref, bias_ref, out_ref, *,
                 feature_dim, latent_att):
    """backbone stand-in -> folded (MHA + proj_1) + ReLU -> mean-pool -> proj_2."""
    # Biases packed one-per-sublane in a single (8, 128) f32 tile.
    b_feat = bias_ref[0:1, 0:feature_dim]          # (1, feature_dim)
    b_fold = bias_ref[1:2, 0:latent_att]           # (1, E) = bh@Wvo@W1 + bvo@W1 + b1
    b_2 = bias_ref[2:3, 0:2]                       # (1, 2)

    x = x_ref[...]                                 # (N, CHW) f32

    # --- backbone stand-in: flatten -> Linear(CHW, feature_dim) -------------
    # TODO(synk): real module uses a pretrained DINOv2 / timm backbone; this is
    # a deterministic synthetic feature extractor (second Linear of the
    # stand-in is folded into wfold_ref below).
    feat = jnp.dot(x, wf_ref[...], preferred_element_type=jnp.float32) + b_feat

    # --- head Linear + length-1 MHA (== out_proj(V)) + proj_1, folded -------
    # All linear, no nonlinearity in between, so a single (feature_dim, E)
    # matmul followed by ReLU is exact.
    h1 = jnp.maximum(
        jnp.dot(feat, wfold_ref[...], preferred_element_type=jnp.float32)
        + b_fold, 0.0)                             # (N, E)

    # --- aggregation (mean over instances) then proj_2 ----------------------
    # TODO(synk): `aggregation` is config-driven in the reference; mean pooling
    # assumed.  Mean is linear, so pooling before proj_2 is exact.
    pooled = jnp.mean(h1, axis=0, keepdims=True)   # (1, E)
    out_ref[...] = jnp.dot(pooled, w2_ref[...],
                           preferred_element_type=jnp.float32) + b_2  # (1, 2)


def prepare_params(params):
    """One-time host-side parameter folding (model-init time, not per call)."""
    feature_dim = params["w_feat"].shape[1]
    E = params["w_head"].shape[1]
    assert feature_dim <= 128 and E <= 128, "bias packing assumes <=128 lanes"

    # Length-1 MultiheadAttention collapses to out_proj(V):
    #   attn = x @ (Wv @ Wo) + (bv @ Wo + bo)
    # (wq/wk/bq/bk exist in the PyTorch module but are mathematically inert.)
    w_vo = params["wv"] @ params["wo"]
    b_vo = params["bv"] @ params["wo"] + params["bo"]

    # Fold head Linear + collapsed MHA + proj_1 into one (feature_dim, E) map.
    w_fold = params["w_head"] @ w_vo @ params["w1"]
    b_fold = (params["b_head"] @ w_vo @ params["w1"]
              + b_vo @ params["w1"] + params["b1"])

    # Pack the three tiny bias vectors into one lane-dense (8, 128) f32 tile.
    bias_pack = jnp.zeros((8, 128), jnp.float32)
    bias_pack = bias_pack.at[0, :feature_dim].set(params["b_feat"][0])
    bias_pack = bias_pack.at[1, :E].set(b_fold[0])
    bias_pack = bias_pack.at[2, :2].set(params["b2"][0])

    return dict(
        w_feat=params["w_feat"].astype(jnp.float32),
        w_fold=w_fold.astype(jnp.float32),
        w2=params["w2"].astype(jnp.float32),
        bias_pack=bias_pack,
        feature_dim=int(feature_dim),
        latent_att=int(E),
    )


def patient_model_attention(x, prepared, *, mode="val", num_heads=1):
    # `mode` only toggles no_grad in PyTorch; `num_heads` only shapes the
    # mathematically inert (L=1) q/k path.  Neither affects the forward output.
    del mode, num_heads

    N, C, H, W = x.shape
    chw = C * H * W

    kernel = functools.partial(fused_kernel,
                               feature_dim=prepared["feature_dim"],
                               latent_att=prepared["latent_att"])
    vmem = lambda: pl.BlockSpec(memory_space=pltpu.MemorySpace.VMEM)
    out = pl.pallas_call(
        kernel,
        out_shape=jax.ShapeDtypeStruct((1, 2), jnp.float32),
        in_specs=[vmem() for _ in range(5)],
        out_specs=vmem(),
    )(x.reshape(N, chw),
      prepared["w_feat"],
      prepared["w_fold"],
      prepared["w2"],
      prepared["bias_pack"])
    return out.reshape(2)


def _reference_forward_np(x, params):
    """Un-folded numpy reference of the full module path (for validation)."""
    p = {k: np.asarray(v, np.float64) for k, v in params.items()}
    xf = np.asarray(x, np.float64).reshape(x.shape[0], -1)
    feat = xf @ p["w_feat"] + p["b_feat"]
    lat = feat @ p["w_head"] + p["b_head"]                 # (N, E)
    # MHA over L=1 sequence: softmax over one key == 1 -> out_proj(V)
    v = lat @ p["wv"] + p["bv"]
    attn = v @ p["wo"] + p["bo"]
    h1 = np.maximum(attn @ p["w1"] + p["b1"], 0.0)
    out = h1 @ p["w2"] + p["b2"]
    return out.mean(axis=0)                                # aggregation: mean


if __name__ == "__main__":
    # Small, module-consistent shapes: one patient with 16 instance slides.
    N, C, H, W = 16, 4, 16, 16
    feature_dim = 64                  # cfg['feature_dim']
    latent_att = 32                   # cfg['latent_att']
    num_heads = 4                     # cfg['head_1']

    key = jax.random.PRNGKey(0)
    ks = jax.random.split(key, 20)

    def init(k, shape):
        return 0.02 * jax.random.normal(k, shape, jnp.float32)

    chw = C * H * W
    params = dict(
        # backbone stand-in
        w_feat=init(ks[1], (chw, feature_dim)),
        b_feat=init(ks[2], (1, feature_dim)),
        w_head=init(ks[3], (feature_dim, latent_att)),
        b_head=init(ks[4], (1, latent_att)),
        # multihead attention, (in, out) layout.  wq/wk/bq/bk exist in the
        # PyTorch module but are inert for an L=1 sequence (softmax == 1).
        wq=init(ks[5], (latent_att, latent_att)),
        bq=init(ks[6], (1, latent_att)),
        wk=init(ks[7], (latent_att, latent_att)),
        bk=init(ks[8], (1, latent_att)),
        wv=init(ks[9], (latent_att, latent_att)),
        bv=init(ks[10], (1, latent_att)),
        wo=init(ks[11], (latent_att, latent_att)),
        bo=init(ks[12], (1, latent_att)),
        # proj_1 / proj_2
        w1=init(ks[13], (latent_att, latent_att)),
        b1=init(ks[14], (1, latent_att)),
        w2=init(ks[15], (latent_att, 2)),
        b2=init(ks[16], (1, 2)),
    )

    x = jax.random.normal(ks[0], (N, C, H, W), jnp.float32)

    # One-time parameter folding (model init); per-call path is reshape + call.
    prepared = prepare_params(params)

    out = patient_model_attention(x, prepared, mode="val", num_heads=num_heads)
    jax.block_until_ready(out)
    assert out.shape == (2,)

    ref = _reference_forward_np(np.asarray(x), params)
    assert np.allclose(np.asarray(out, np.float64), ref, rtol=1e-2, atol=1e-3), (
        out, ref)
    print("KERNEL_OK")
</pallas_src>

<mosaic_0001>
module attributes {stable_mosaic.version = 11 : i64} {
  func.func @fused_kernel(%arg0: memref<16x1024xf32, #tpu.memory_space<vmem>>, %arg1: memref<1024x64xf32, #tpu.memory_space<vmem>>, %arg2: memref<64x32xf32, #tpu.memory_space<vmem>>, %arg3: memref<32x2xf32, #tpu.memory_space<vmem>>, %arg4: memref<8x128xf32, #tpu.memory_space<vmem>>, %arg5: memref<1x2xf32, #tpu.memory_space<vmem>>) attributes {dimension_semantics = [], scalar_prefetch = 0 : i64, scratch_operands = 0 : i64, tpu.core_type = #tpu.core_type<tc>} {
    %c0 = arith.constant 0 : index
    %c0_0 = arith.constant 0 : index
    %0 = vector.load %arg4[%c0, %c0_0] : memref<8x128xf32, #tpu.memory_space<vmem>>, vector<1x64xf32>
    %c1 = arith.constant 1 : index
    %c0_1 = arith.constant 0 : index
    %1 = vector.load %arg4[%c1, %c0_1] : memref<8x128xf32, #tpu.memory_space<vmem>>, vector<1x32xf32>
    %c2 = arith.constant 2 : index
    %c0_2 = arith.constant 0 : index
    %2 = vector.load %arg4[%c2, %c0_2] : memref<8x128xf32, #tpu.memory_space<vmem>>, vector<1x2xf32>
    %c0_3 = arith.constant 0 : index
    %c0_4 = arith.constant 0 : index
    %3 = vector.load %arg0[%c0_3, %c0_4] : memref<16x1024xf32, #tpu.memory_space<vmem>>, vector<16x1024xf32>
    %c0_5 = arith.constant 0 : index
    %c0_6 = arith.constant 0 : index
    %4 = vector.load %arg1[%c0_5, %c0_6] : memref<1024x64xf32, #tpu.memory_space<vmem>>, vector<1024x64xf32>
    %cst = arith.constant dense<0.000000e+00> : vector<16x64xf32>
    %5 = tpu.matmul %3, %4, %cst {dimension_numbers = #tpu.dot_dimension_numbers<[1], [0], [0], [1], [0, 0, 1, 1], [], []>} : vector<16x1024xf32>, vector<1024x64xf32>, vector<16x64xf32> -> vector<16x64xf32>
    %6 = vector.broadcast %0 : vector<1x64xf32> to vector<16x64xf32>
    %7 = arith.addf %5, %6 : vector<16x64xf32>
    %c0_7 = arith.constant 0 : index
    %c0_8 = arith.constant 0 : index
    %8 = vector.load %arg2[%c0_7, %c0_8] : memref<64x32xf32, #tpu.memory_space<vmem>>, vector<64x32xf32>
    %cst_9 = arith.constant dense<0.000000e+00> : vector<16x32xf32>
    %9 = tpu.matmul %7, %8, %cst_9 {dimension_numbers = #tpu.dot_dimension_numbers<[1], [0], [0], [1], [0, 0, 1, 1], [], []>} : vector<16x64xf32>, vector<64x32xf32>, vector<16x32xf32> -> vector<16x32xf32>
    %10 = vector.broadcast %1 : vector<1x32xf32> to vector<16x32xf32>
    %11 = arith.addf %9, %10 : vector<16x32xf32>
    %cst_10 = arith.constant 0.000000e+00 : f32
    %12 = vector.broadcast %cst_10 : f32 to vector<16x32xf32>
    %13 = arith.maximumf %11, %12 : vector<16x32xf32>
    %cst_11 = arith.constant dense<0.000000e+00> : vector<32xf32>
    %14 = vector.multi_reduction <add>, %13, %cst_11 [0] : vector<16x32xf32> to vector<32xf32>
    %15 = vector.shape_cast %14 : vector<32xf32> to vector<1x32xf32>
    %cst_12 = arith.constant 1.600000e+01 : f32
    %16 = vector.broadcast %cst_12 : f32 to vector<1x32xf32>
    %17 = arith.divf %15, %16 : vector<1x32xf32>
    %c0_13 = arith.constant 0 : index
    %c0_14 = arith.constant 0 : index
    %18 = vector.load %arg3[%c0_13, %c0_14] : memref<32x2xf32, #tpu.memory_space<vmem>>, vector<32x2xf32>
    %cst_15 = arith.constant dense<0.000000e+00> : vector<1x2xf32>
    %19 = tpu.matmul %17, %18, %cst_15 {dimension_numbers = #tpu.dot_dimension_numbers<[1], [0], [0], [1], [0, 0, 1, 1], [], []>} : vector<1x32xf32>, vector<32x2xf32>, vector<1x2xf32> -> vector<1x2xf32>
    %20 = arith.addf %19, %2 : vector<1x2xf32>
    %c0_16 = arith.constant 0 : index
    %c0_17 = arith.constant 0 : index
    %21 = vector.load %arg5[%c0_16, %c0_17] : memref<1x2xf32, #tpu.memory_space<vmem>>, vector<1x2xf32>
    tpu.vector_store %arg5[%c0_16, %c0_17], %20 {strides = array<i32>} : memref<1x2xf32, #tpu.memory_space<vmem>>, vector<1x2xf32>,
    return
  }
}

</mosaic_0001>

<llo_original>
// kernel: tpu_custom_call.1
$region0: #{tpu_custom_call.1}
  #allocation0 [shape = 'u32[]', space=smem, size = 0x4, offset = 0x4, fixed_abs, tag = 'smem constant byte address 0x4 - core index']
  #allocation1 [shape = 'u32[144,128]{1,0:T(1,128)}', space=vmem, size = 0x12000, scoped, tag = 'internal scratch']
  %s0 = inlined_call_operand.vmem [shape: f32[16,1024], index: 0, kind: input, shape index: {}]
  %s1 = inlined_call_operand.vmem [shape: f32[1024,64], index: 1, kind: input, shape index: {}]
  %s2 = inlined_call_operand.vmem [shape: f32[64,32], index: 2, kind: input, shape index: {}]
  %s3 = inlined_call_operand.vmem [shape: f32[32,2], index: 3, kind: input, shape index: {}]
  %s4 = inlined_call_operand.vmem [shape: f32[8,128], index: 4, kind: input, shape index: {}]
  %s5 = inlined_call_operand.hbm [shape: f32[1,2], index: 5, kind: output, shape index: {}]
  %s6 = sld [smem:[#allocation0]]
  $region30: #{tpu_custom_call.1} parent=0
    _
  %s8 = ssub.s32 1, %s6
  %s9 = scalar_select 0, %s8, %s6
  $region1: #{tpu_custom_call.1} parent=0
    #allocation2 [shape = 'u8[512]{0}', space=vmem, size = 0x400, scoped, tag = 'output window, operand 0, single buffered']
    #allocation3 [shape = 's32[1]{0}', space=sflag, size = 0x4, scoped, tag = 'scoped memory for tpu_custom_call.1']
    %10 = vsyncpa [#allocation3], 0
    // Predicated region
    $region2: #{tpu_custom_call.1} parent=1 // pred_check
      _
    $region3: #{tpu_custom_call.1} parent=1 // pred_check_branch
      %12 = sbr.rel (0) target = $region5
    $region4: #{tpu_custom_call.1} parent=1 // pred_region
      _
    $region5: #{tpu_custom_call.1} parent=1 // pred_fallthru
      _
    // Predicated region
    $region6: #{tpu_custom_call.1} parent=1 // pred_check
      _
    $region7: #{tpu_custom_call.1} parent=1 // pred_check_branch
      %14 = sbr.rel (0) target = $region9
    $region8: #{tpu_custom_call.1} parent=1 // pred_region
      _
    $region9: #{tpu_custom_call.1} parent=1 // pred_fallthru
      _
    // Predicated region
    $region10: #{tpu_custom_call.1} parent=1 // pred_check
      _
    $region11: #{tpu_custom_call.1} parent=1 // pred_check_branch
      %16 = sbr.rel (0) target = $region13
    $region12: #{tpu_custom_call.1} parent=1 // pred_region
      _
    $region13: #{tpu_custom_call.1} parent=1 // pred_fallthru
      _
    // Predicated region
    $region14: #{tpu_custom_call.1} parent=1 // pred_check
      _
    $region15: #{tpu_custom_call.1} parent=1 // pred_check_branch
      %18 = sbr.rel (0) target = $region17
    $region16: #{tpu_custom_call.1} parent=1 // pred_region
      _
    $region17: #{tpu_custom_call.1} parent=1 // pred_fallthru
      _
    // Predicated region
    $region18: #{tpu_custom_call.1} parent=1 // pred_check
      _
    $region19: #{tpu_custom_call.1} parent=1 // pred_check_branch
      %20 = sbr.rel (0) target = $region21
    $region20: #{tpu_custom_call.1} parent=1 // pred_region
      _
    $region21: #{tpu_custom_call.1} parent=1 // pred_fallthru
      _
    %v21 = vld [vmem:[%s4] sm:$0x1]
    %v22 = vld [vmem:[%s4 + $0x1] sm:$0x1]
    %v23 = vld [vmem:[%s4 + $0x2] sm:$0x1]
    %v24 = vld [vmem:[%s0] sm:$0xff]
    %v25 = vld [vmem:[%s0 + $0x8] sm:$0xff]
    %v26 = vld [vmem:[%s0 + $0x10] sm:$0xff]
    %v27 = vld [vmem:[%s0 + $0x18] sm:$0xff]
    %v28 = vld [vmem:[%s0 + $0x20] sm:$0xff]
    %v29 = vld [vmem:[%s0 + $0x28] sm:$0xff]
    %v30 = vld [vmem:[%s0 + $0x30] sm:$0xff]
    %v31 = vld [vmem:[%s0 + $0x38] sm:$0xff]
    %v32 = vld [vmem:[%s0 + $0x40] sm:$0xff]
    %v33 = vld [vmem:[%s0 + $0x48] sm:$0xff]
    %v34 = vld [vmem:[%s0 + $0x50] sm:$0xff]
    %v35 = vld [vmem:[%s0 + $0x58] sm:$0xff]
    %v36 = vld [vmem:[%s0 + $0x60] sm:$0xff]
    %v37 = vld [vmem:[%s0 + $0x68] sm:$0xff]
    %v38 = vld [vmem:[%s0 + $0x70] sm:$0xff]
    %v39 = vld [vmem:[%s0 + $0x78] sm:$0xff]
    %v40 = vld [vmem:[%s1] sm:$0xff]
    %v41 = vld [vmem:[%s1 + $0x8] sm:$0xff]
    %v42 = vld [vmem:[%s1 + $0x10] sm:$0xff]
    %v43 = vld [vmem:[%s1 + $0x18] sm:$0xff]
    %v44 = vld [vmem:[%s1 + $0x20] sm:$0xff]
    %v45 = vld [vmem:[%s1 + $0x28] sm:$0xff]
    %v46 = vld [vmem:[%s1 + $0x30] sm:$0xff]
    %v47 = vld [vmem:[%s1 + $0x38] sm:$0xff]
    %v48 = vld [vmem:[%s1 + $0x40] sm:$0xff]
    %v49 = vld [vmem:[%s1 + $0x48] sm:$0xff]
    %v50 = vld [vmem:[%s1 + $0x50] sm:$0xff]
    %v51 = vld [vmem:[%s1 + $0x58] sm:$0xff]
    %v52 = vld [vmem:[%s1 + $0x60] sm:$0xff]
    %v53 = vld [vmem:[%s1 + $0x68] sm:$0xff]
    %v54 = vld [vmem:[%s1 + $0x70] sm:$0xff]
    %v55 = vld [vmem:[%s1 + $0x78] sm:$0xff]
    %v56 = vld [vmem:[%s1 + $0x80] sm:$0xff]
    %v57 = vld [vmem:[%s1 + $0x88] sm:$0xff]
    %v58 = vld [vmem:[%s1 + $0x90] sm:$0xff]
    %v59 = vld [vmem:[%s1 + $0x98] sm:$0xff]
    %v60 = vld [vmem:[%s1 + $0xa0] sm:$0xff]
    %v61 = vld [vmem:[%s1 + $0xa8] sm:$0xff]
    %v62 = vld [vmem:[%s1 + $0xb0] sm:$0xff]
    %v63 = vld [vmem:[%s1 + $0xb8] sm:$0xff]
    %v64 = vld [vmem:[%s1 + $0xc0] sm:$0xff]
    %v65 = vld [vmem:[%s1 + $0xc8] sm:$0xff]
    %v66 = vld [vmem:[%s1 + $0xd0] sm:$0xff]
    %v67 = vld [vmem:[%s1 + $0xd8] sm:$0xff]
    %v68 = vld [vmem:[%s1 + $0xe0] sm:$0xff]
    %v69 = vld [vmem:[%s1 + $0xe8] sm:$0xff]
    %v70 = vld [vmem:[%s1 + $0xf0] sm:$0xff]
    %v71 = vld [vmem:[%s1 + $0xf8] sm:$0xff]
    %v72 = vld [vmem:[%s1 + $0x100] sm:$0xff]
    %v73 = vld [vmem:[%s1 + $0x108] sm:$0xff]
    %v74 = vld [vmem:[%s1 + $0x110] sm:$0xff]
    %v75 = vld [vmem:[%s1 + $0x118] sm:$0xff]
    %v76 = vld [vmem:[%s1 + $0x120] sm:$0xff]
    %v77 = vld [vmem:[%s1 + $0x128] sm:$0xff]
    %v78 = vld [vmem:[%s1 + $0x130] sm:$0xff]
    %v79 = vld [vmem:[%s1 + $0x138] sm:$0xff]
    %v80 = vld [vmem:[%s1 + $0x140] sm:$0xff]
    %v81 = vld [vmem:[%s1 + $0x148] sm:$0xff]
    %v82 = vld [vmem:[%s1 + $0x150] sm:$0xff]
    %v83 = vld [vmem:[%s1 + $0x158] sm:$0xff]
    %v84 = vld [vmem:[%s1 + $0x160] sm:$0xff]
    %v85 = vld [vmem:[%s1 + $0x168] sm:$0xff]
    %v86 = vld [vmem:[%s1 + $0x170] sm:$0xff]
    %v87 = vld [vmem:[%s1 + $0x178] sm:$0xff]
    %v88 = vld [vmem:[%s1 + $0x180] sm:$0xff]
    %v89 = vld [vmem:[%s1 + $0x188] sm:$0xff]
    %v90 = vld [vmem:[%s1 + $0x190] sm:$0xff]
    %v91 = vld [vmem:[%s1 + $0x198] sm:$0xff]
    %v92 = vld [vmem:[%s1 + $0x1a0] sm:$0xff]
    %v93 = vld [vmem:[%s1 + $0x1a8] sm:$0xff]
    %v94 = vld [vmem:[%s1 + $0x1b0] sm:$0xff]
    %v95 = vld [vmem:[%s1 + $0x1b8] sm:$0xff]
    %v96 = vld [vmem:[%s1 + $0x1c0] sm:$0xff]
    %v97 = vld [vmem:[%s1 + $0x1c8] sm:$0xff]
    %v98 = vld [vmem:[%s1 + $0x1d0] sm:$0xff]
    %v99 = vld [vmem:[%s1 + $0x1d8] sm:$0xff]
    %v100 = vld [vmem:[%s1 + $0x1e0] sm:$0xff]
    %v101 = vld [vmem:[%s1 + $0x1e8] sm:$0xff]
    %v102 = vld [vmem:[%s1 + $0x1f0] sm:$0xff]
    %v103 = vld [vmem:[%s1 + $0x1f8] sm:$0xff]
    %v104 = vld [vmem:[%s1 + $0x200] sm:$0xff]
    %v105 = vld [vmem:[%s1 + $0x208] sm:$0xff]
    %v106 = vld [vmem:[%s1 + $0x210] sm:$0xff]
    %v107 = vld [vmem:[%s1 + $0x218] sm:$0xff]
    %v108 = vld [vmem:[%s1 + $0x220] sm:$0xff]
    %v109 = vld [vmem:[%s1 + $0x228] sm:$0xff]
    %v110 = vld [vmem:[%s1 + $0x230] sm:$0xff]
    %v111 = vld [vmem:[%s1 + $0x238] sm:$0xff]
    %v112 = vld [vmem:[%s1 + $0x240] sm:$0xff]
    %v113 = vld [vmem:[%s1 + $0x248] sm:$0xff]
    %v114 = vld [vmem:[%s1 + $0x250] sm:$0xff]
    %v115 = vld [vmem:[%s1 + $0x258] sm:$0xff]
    %v116 = vld [vmem:[%s1 + $0x260] sm:$0xff]
    %v117 = vld [vmem:[%s1 + $0x268] sm:$0xff]
    %v118 = vld [vmem:[%s1 + $0x270] sm:$0xff]
    %v119 = vld [vmem:[%s1 + $0x278] sm:$0xff]
    %v120 = vld [vmem:[%s1 + $0x280] sm:$0xff]
    %v121 = vld [vmem:[%s1 + $0x288] sm:$0xff]
    %v122 = vld [vmem:[%s1 + $0x290] sm:$0xff]
    %v123 = vld [vmem:[%s1 + $0x298] sm:$0xff]
    %v124 = vld [vmem:[%s1 + $0x2a0] sm:$0xff]
    %v125 = vld [vmem:[%s1 + $0x2a8] sm:$0xff]
    %v126 = vld [vmem:[%s1 + $0x2b0] sm:$0xff]
    %v127 = vld [vmem:[%s1 + $0x2b8] sm:$0xff]
    %v128 = vld [vmem:[%s1 + $0x2c0] sm:$0xff]
    %v129 = vld [vmem:[%s1 + $0x2c8] sm:$0xff]
    %v130 = vld [vmem:[%s1 + $0x2d0] sm:$0xff]
    %v131 = vld [vmem:[%s1 + $0x2d8] sm:$0xff]
    %v132 = vld [vmem:[%s1 + $0x2e0] sm:$0xff]
    %v133 = vld [vmem:[%s1 + $0x2e8] sm:$0xff]
    %v134 = vld [vmem:[%s1 + $0x2f0] sm:$0xff]
    %v135 = vld [vmem:[%s1 + $0x2f8] sm:$0xff]
    %v136 = vld [vmem:[%s1 + $0x300] sm:$0xff]
    %v137 = vld [vmem:[%s1 + $0x308] sm:$0xff]
    %v138 = vld [vmem:[%s1 + $0x310] sm:$0xff]
    %v139 = vld [vmem:[%s1 + $0x318] sm:$0xff]
    %v140 = vld [vmem:[%s1 + $0x320] sm:$0xff]
    %v141 = vld [vmem:[%s1 + $0x328] sm:$0xff]
    %v142 = vld [vmem:[%s1 + $0x330] sm:$0xff]
    %v143 = vld [vmem:[%s1 + $0x338] sm:$0xff]
    %v144 = vld [vmem:[%s1 + $0x340] sm:$0xff]
    %v145 = vld [vmem:[%s1 + $0x348] sm:$0xff]
    %v146 = vld [vmem:[%s1 + $0x350] sm:$0xff]
    %v147 = vld [vmem:[%s1 + $0x358] sm:$0xff]
    %v148 = vld [vmem:[%s1 + $0x360] sm:$0xff]
    %v149 = vld [vmem:[%s1 + $0x368] sm:$0xff]
    %v150 = vld [vmem:[%s1 + $0x370] sm:$0xff]
    %v151 = vld [vmem:[%s1 + $0x378] sm:$0xff]
    %v152 = vld [vmem:[%s1 + $0x380] sm:$0xff]
    %v153 = vld [vmem:[%s1 + $0x388] sm:$0xff]
    %v154 = vld [vmem:[%s1 + $0x390] sm:$0xff]
    %v155 = vld [vmem:[%s1 + $0x398] sm:$0xff]
    %v156 = vld [vmem:[%s1 + $0x3a0] sm:$0xff]
    %v157 = vld [vmem:[%s1 + $0x3a8] sm:$0xff]
    %v158 = vld [vmem:[%s1 + $0x3b0] sm:$0xff]
    %v159 = vld [vmem:[%s1 + $0x3b8] sm:$0xff]
    %v160 = vld [vmem:[%s1 + $0x3c0] sm:$0xff]
    %v161 = vld [vmem:[%s1 + $0x3c8] sm:$0xff]
    %v162 = vld [vmem:[%s1 + $0x3d0] sm:$0xff]
    %v163 = vld [vmem:[%s1 + $0x3d8] sm:$0xff]
    %v164 = vld [vmem:[%s1 + $0x3e0] sm:$0xff]
    %v165 = vld [vmem:[%s1 + $0x3e8] sm:$0xff]
    %v166 = vld [vmem:[%s1 + $0x3f0] sm:$0xff]
    %v167 = vld [vmem:[%s1 + $0x3f8] sm:$0xff]
    %v168 = vlaneseq
    %v169 = vshrl.u32 %v168, 7
    %v170 = vsub.s32 0, %v169
    %v171 = vrot.slane %v21, %v170
    %172 = vmatprep.subr.mxu0 0.0
    %173 = vmatpush1.msra.mxu0 %v40
    %174 = vmatprep.subr.mxu0 0.0
    %175 = vmatpush1.msra.mxu0 %v41
    %176 = vmatprep.subr.mxu0 0.0
    %177 = vmatpush1.msra.mxu0 %v42
    %178 = vmatprep.subr.mxu0 0.0
    %179 = vmatpush1.msra.mxu0 %v43
    %180 = vmatprep.subr.mxu0 0.0
    %181 = vmatpush1.msra.mxu0 %v44
    %182 = vmatprep.subr.mxu0 0.0
    %183 = vmatpush1.msra.mxu0 %v45
    %184 = vmatprep.subr.mxu0 0.0
    %185 = vmatpush1.msra.mxu0 %v46
    %186 = vmatprep.subr.mxu0 0.0
    %187 = vmatpush1.msra.mxu0 %v47
    %188 = vmatprep.subr.mxu0 0.0
    %189 = vmatpush1.msra.mxu0 %v48
    %190 = vmatprep.subr.mxu0 0.0
    %191 = vmatpush1.msra.mxu0 %v49
    %192 = vmatprep.subr.mxu0 0.0
    %193 = vmatpush1.msra.mxu0 %v50
    %194 = vmatprep.subr.mxu0 0.0
    %195 = vmatpush1.msra.mxu0 %v51
    %196 = vmatprep.subr.mxu0 0.0
    %197 = vmatpush1.msra.mxu0 %v52
    %198 = vmatprep.subr.mxu0 0.0
    %199 = vmatpush1.msra.mxu0 %v53
    %200 = vmatprep.subr.mxu0 0.0
    %201 = vmatpush1.msra.mxu0 %v54
    %202 = vmatprep.subr.mxu0 0.0
    %203 = vmatpush1.msra.mxu0 %v55
    %204 = vmatprep.subr.mxu0 0.0
    %205 = vmatpush1.msra.mxu0 %v56
    %206 = vmatprep.subr.mxu0 0.0
    %207 = vmatpush1.msra.mxu0 %v57
    %208 = vmatprep.subr.mxu0 0.0
    %209 = vmatpush1.msra.mxu0 %v58
    %210 = vmatprep.subr.mxu0 0.0
    %211 = vmatpush1.msra.mxu0 %v59
    %212 = vmatprep.subr.mxu0 0.0
    %213 = vmatpush1.msra.mxu0 %v60
    %214 = vmatprep.subr.mxu0 0.0
    %215 = vmatpush1.msra.mxu0 %v61
    %216 = vmatprep.subr.mxu0 0.0
    %217 = vmatpush1.msra.mxu0 %v62
    %218 = vmatprep.subr.mxu0 0.0
    %219 = vmatpush1.msra.mxu0 %v63
    %220 = vmatprep.subr.mxu0 0.0
    %221 = vmatpush1.msra.mxu0 %v64
    %222 = vmatprep.subr.mxu0 0.0
    %223 = vmatpush1.msra.mxu0 %v65
    %224 = vmatprep.subr.mxu0 0.0
    %225 = vmatpush1.msra.mxu0 %v66
    %226 = vmatprep.subr.mxu0 0.0
    %227 = vmatpush1.msra.mxu0 %v67
    %228 = vmatprep.subr.mxu0 0.0
    %229 = vmatpush1.msra.mxu0 %v68
    %230 = vmatprep.subr.mxu0 0.0
    %231 = vmatpush1.msra.mxu0 %v69
    %232 = vmatprep.subr.mxu0 0.0
    %233 = vmatpush1.msra.mxu0 %v70
    %234 = vmatprep.subr.mxu0 0.0
    %235 = vmatpush1.msra.mxu0 %v71
    %236 = vmatprep.mubr.f32.mxu0 %v25
    %237 = vmatmul.mubr.f32.gmra.mrb[0].mxu0 %v24
    %v238 = vpop.f32.mrb[0].mxu0
    %v239 = vadd.f32 %v171, %v238
    %v240 = vpop.f32.mrb[0].mxu0
    %241 = vmatprep.mubr.f32.mxu0 %v33
    %242 = vmatmul.mubr.f32.gmra.mrb[0].mxu0 %v32
    %v243 = vpop.f32.mrb[0].mxu0
    %v244 = vadd.f32 %v171, %v243
    %v245 = vpop.f32.mrb[0].mxu0
    %246 = vdwg.mxu0
    %247 = vmatprep.subr.mxu0 0.0
    %248 = vmatpush1.msra.mxu0 %v72
    %249 = vmatprep.subr.mxu0 0.0
    %250 = vmatpush1.msra.mxu0 %v73
    %251 = vmatprep.subr.mxu0 0.0
    %252 = vmatpush1.msra.mxu0 %v74
    %253 = vmatprep.subr.mxu0 0.0
    %254 = vmatpush1.msra.mxu0 %v75
    %255 = vmatprep.subr.mxu0 0.0
    %256 = vmatpush1.msra.mxu0 %v76
    %257 = vmatprep.subr.mxu0 0.0
    %258 = vmatpush1.msra.mxu0 %v77
    %259 = vmatprep.subr.mxu0 0.0
    %260 = vmatpush1.msra.mxu0 %v78
    %261 = vmatprep.subr.mxu0 0.0
    %262 = vmatpush1.msra.mxu0 %v79
    %263 = vmatprep.subr.mxu0 0.0
    %264 = vmatpush1.msra.mxu0 %v80
    %265 = vmatprep.subr.mxu0 0.0
    %266 = vmatpush1.msra.mxu0 %v81
    %267 = vmatprep.subr.mxu0 0.0
    %268 = vmatpush1.msra.mxu0 %v82
    %269 = vmatprep.subr.mxu0 0.0
    %270 = vmatpush1.msra.mxu0 %v83
    %271 = vmatprep.subr.mxu0 0.0
    %272 = vmatpush1.msra.mxu0 %v84
    %273 = vmatprep.subr.mxu0 0.0
    %274 = vmatpush1.msra.mxu0 %v85
    %275 = vmatprep.subr.mxu0 0.0
    %276 = vmatpush1.msra.mxu0 %v86
    %277 = vmatprep.subr.mxu0 0.0
    %278 = vmatpush1.msra.mxu0 %v87
    %279 = vmatprep.subr.mxu0 0.0
    %280 = vmatpush1.msra.mxu0 %v88
    %281 = vmatprep.subr.mxu0 0.0
    %282 = vmatpush1.msra.mxu0 %v89
    %283 = vmatprep.subr.mxu0 0.0
    %284 = vmatpush1.msra.mxu0 %v90
    %285 = vmatprep.subr.mxu0 0.0
    %286 = vmatpush1.msra.mxu0 %v91
    %287 = vmatprep.subr.mxu0 0.0
    %288 = vmatpush1.msra.mxu0 %v92
    %289 = vmatprep.subr.mxu0 0.0
    %290 = vmatpush1.msra.mxu0 %v93
    %291 = vmatprep.subr.mxu0 0.0
    %292 = vmatpush1.msra.mxu0 %v94
    %293 = vmatprep.subr.mxu0 0.0
    %294 = vmatpush1.msra.mxu0 %v95
    %295 = vmatprep.subr.mxu0 0.0
    %296 = vmatpush1.msra.mxu0 %v96
    %297 = vmatprep.subr.mxu0 0.0
    %298 = vmatpush1.msra.mxu0 %v97
    %299 = vmatprep.subr.mxu0 0.0
    %300 = vmatpush1.msra.mxu0 %v98
    %301 = vmatprep.subr.mxu0 0.0
    %302 = vmatpush1.msra.mxu0 %v99
    %303 = vmatprep.subr.mxu0 0.0
    %304 = vmatpush1.msra.mxu0 %v100
    %305 = vmatprep.subr.mxu0 0.0
    %306 = vmatpush1.msra.mxu0 %v101
    %307 = vmatprep.subr.mxu0 0.0
    %308 = vmatpush1.msra.mxu0 %v102
    %309 = vmatprep.subr.mxu0 0.0
    %310 = vmatpush1.msra.mxu0 %v103
    %311 = vmatprep.mubr.f32.mxu0 %v27
    %312 = vmatmul.mubr.f32.gmra.mrb[0].mxu0 %v26
    %v313 = vpop.f32.mrb[0].mxu0
    %v314 = vadd.f32 %v239, %v313
    %v315 = vpop.f32.mrb[0].mxu0
    %316 = vmatprep.mubr.f32.mxu0 %v35
    %317 = vmatmul.mubr.f32.gmra.mrb[0].mxu0 %v34
    %v318 = vpop.f32.mrb[0].mxu0
    %v319 = vadd.f32 %v244, %v318
    %v320 = vpop.f32.mrb[0].mxu0
    %321 = vdwg.mxu0
    %322 = vmatprep.subr.mxu0 0.0
    %323 = vmatpush1.msra.mxu0 %v104
    %324 = vmatprep.subr.mxu0 0.0
    %325 = vmatpush1.msra.mxu0 %v105
    %326 = vmatprep.subr.mxu0 0.0
    %327 = vmatpush1.msra.mxu0 %v106
    %328 = vmatprep.subr.mxu0 0.0
    %329 = vmatpush1.msra.mxu0 %v107
    %330 = vmatprep.subr.mxu0 0.0
    %331 = vmatpush1.msra.mxu0 %v108
    %332 = vmatprep.subr.mxu0 0.0
    %333 = vmatpush1.msra.mxu0 %v109
    %334 = vmatprep.subr.mxu0 0.0
    %335 = vmatpush1.msra.mxu0 %v110
    %336 = vmatprep.subr.mxu0 0.0
    %337 = vmatpush1.msra.mxu0 %v111
    %338 = vmatprep.subr.mxu0 0.0
    %339 = vmatpush1.msra.mxu0 %v112
    %340 = vmatprep.subr.mxu0 0.0
    %341 = vmatpush1.msra.mxu0 %v113
    %342 = vmatprep.subr.mxu0 0.0
    %343 = vmatpush1.msra.mxu0 %v114
    %344 = vmatprep.subr.mxu0 0.0
    %345 = vmatpush1.msra.mxu0 %v115
    %346 = vmatprep.subr.mxu0 0.0
    %347 = vmatpush1.msra.mxu0 %v116
    %348 = vmatprep.subr.mxu0 0.0
    %349 = vmatpush1.msra.mxu0 %v117
    %350 = vmatprep.subr.mxu0 0.0
    %351 = vmatpush1.msra.mxu0 %v118
    %352 = vmatprep.subr.mxu0 0.0
    %353 = vmatpush1.msra.mxu0 %v119
    %354 = vmatprep.subr.mxu0 0.0
    %355 = vmatpush1.msra.mxu0 %v120
    %356 = vmatprep.subr.mxu0 0.0
    %357 = vmatpush1.msra.mxu0 %v121
    %358 = vmatprep.subr.mxu0 0.0
    %359 = vmatpush1.msra.mxu0 %v122
    %360 = vmatprep.subr.mxu0 0.0
    %361 = vmatpush1.msra.mxu0 %v123
    %362 = vmatprep.subr.mxu0 0.0
    %363 = vmatpush1.msra.mxu0 %v124
    %364 = vmatprep.subr.mxu0 0.0
    %365 = vmatpush1.msra.mxu0 %v125
    %366 = vmatprep.subr.mxu0 0.0
    %367 = vmatpush1.msra.mxu0 %v126
    %368 = vmatprep.subr.mxu0 0.0
    %369 = vmatpush1.msra.mxu0 %v127
    %370 = vmatprep.subr.mxu0 0.0
    %371 = vmatpush1.msra.mxu0 %v128
    %372 = vmatprep.subr.mxu0 0.0
    %373 = vmatpush1.msra.mxu0 %v129
    %374 = vmatprep.subr.mxu0 0.0
    %375 = vmatpush1.msra.mxu0 %v130
    %376 = vmatprep.subr.mxu0 0.0
    %377 = vmatpush1.msra.mxu0 %v131
    %378 = vmatprep.subr.mxu0 0.0
    %379 = vmatpush1.msra.mxu0 %v132
    %380 = vmatprep.subr.mxu0 0.0
    %381 = vmatpush1.msra.mxu0 %v133
    %382 = vmatprep.subr.mxu0 0.0
    %383 = vmatpush1.msra.mxu0 %v134
    %384 = vmatprep.subr.mxu0 0.0
    %385 = vmatpush1.msra.mxu0 %v135
    %386 = vmatprep.mubr.f32.mxu0 %v29
    %387 = vmatmul.mubr.f32.gmra.mrb[0].mxu0 %v28
    %v388 = vpop.f32.mrb[0].mxu0
    %v389 = vadd.f32 %v314, %v388
    %v390 = vpop.f32.mrb[0].mxu0
    %391 = vmatprep.mubr.f32.mxu0 %v37
    %392 = vmatmul.mubr.f32.gmra.mrb[0].mxu0 %v36
    %v393 = vpop.f32.mrb[0].mxu0
    %v394 = vadd.f32 %v319, %v393
    %v395 = vpop.f32.mrb[0].mxu0
    %396 = vdwg.mxu0
    %397 = vmatprep.subr.mxu0 0.0
    %398 = vmatpush1.msra.mxu0 %v136
    %399 = vmatprep.subr.mxu0 0.0
    %400 = vmatpush1.msra.mxu0 %v137
    %401 = vmatprep.subr.mxu0 0.0
    %402 = vmatpush1.msra.mxu0 %v138
    %403 = vmatprep.subr.mxu0 0.0
    %404 = vmatpush1.msra.mxu0 %v139
    %405 = vmatprep.subr.mxu0 0.0
    %406 = vmatpush1.msra.mxu0 %v140
    %407 = vmatprep.subr.mxu0 0.0
    %408 = vmatpush1.msra.mxu0 %v141
    %409 = vmatprep.subr.mxu0 0.0
    %410 = vmatpush1.msra.mxu0 %v142
    %411 = vmatprep.subr.mxu0 0.0
    %412 = vmatpush1.msra.mxu0 %v143
    %413 = vmatprep.subr.mxu0 0.0
    %414 = vmatpush1.msra.mxu0 %v144
    %415 = vmatprep.subr.mxu0 0.0
    %416 = vmatpush1.msra.mxu0 %v145
    %417 = vmatprep.subr.mxu0 0.0
    %418 = vmatpush1.msra.mxu0 %v146
    %419 = vmatprep.subr.mxu0 0.0
    %420 = vmatpush1.msra.mxu0 %v147
    %421 = vmatprep.subr.mxu0 0.0
    %422 = vmatpush1.msra.mxu0 %v148
    %423 = vmatprep.subr.mxu0 0.0
    %424 = vmatpush1.msra.mxu0 %v149
    %425 = vmatprep.subr.mxu0 0.0
    %426 = vmatpush1.msra.mxu0 %v150
    %427 = vmatprep.subr.mxu0 0.0
    %428 = vmatpush1.msra.mxu0 %v151
    %429 = vmatprep.subr.mxu0 0.0
    %430 = vmatpush1.msra.mxu0 %v152
    %431 = vmatprep.subr.mxu0 0.0
    %432 = vmatpush1.msra.mxu0 %v153
    %433 = vmatprep.subr.mxu0 0.0
    %434 = vmatpush1.msra.mxu0 %v154
    %435 = vmatprep.subr.mxu0 0.0
    %436 = vmatpush1.msra.mxu0 %v155
    %437 = vmatprep.subr.mxu0 0.0
    %438 = vmatpush1.msra.mxu0 %v156
    %439 = vmatprep.subr.mxu0 0.0
    %440 = vmatpush1.msra.mxu0 %v157
    %441 = vmatprep.subr.mxu0 0.0
    %442 = vmatpush1.msra.mxu0 %v158
    %443 = vmatprep.subr.mxu0 0.0
    %444 = vmatpush1.msra.mxu0 %v159
    %445 = vmatprep.subr.mxu0 0.0
    %446 = vmatpush1.msra.mxu0 %v160
    %447 = vmatprep.subr.mxu0 0.0
    %448 = vmatpush1.msra.mxu0 %v161
    %449 = vmatprep.subr.mxu0 0.0
    %450 = vmatpush1.msra.mxu0 %v162
    %451 = vmatprep.subr.mxu0 0.0
    %452 = vmatpush1.msra.mxu0 %v163
    %453 = vmatprep.subr.mxu0 0.0
    %454 = vmatpush1.msra.mxu0 %v164
    %455 = vmatprep.subr.mxu0 0.0
    %456 = vmatpush1.msra.mxu0 %v165
    %457 = vmatprep.subr.mxu0 0.0
    %458 = vmatpush1.msra.mxu0 %v166
    %459 = vmatprep.subr.mxu0 0.0
    %460 = vmatpush1.msra.mxu0 %v167
    %461 = vmatprep.mubr.f32.mxu0 %v31
    %462 = vmatmul.mubr.f32.gmra.mrb[0].mxu0 %v30
    %v463 = vpop.f32.mrb[0].mxu0
    %v464 = vadd.f32 %v389, %v463
    %v465 = vpop.f32.mrb[0].mxu0
    %466 = vmatprep.mubr.f32.mxu0 %v39
    %467 = vmatmul.mubr.f32.gmra.mrb[0].mxu0 %v38
    %v468 = vpop.f32.mrb[0].mxu0
    %v469 = vadd.f32 %v394, %v468
    %v470 = vpop.f32.mrb[0].mxu0
    %471 = vdwg.mxu0
    %v472 = vld [vmem:[%s2] sm:$0xff]
    %v473 = vld [vmem:[%s2 + $0x8] sm:$0xff]
    %v474 = vld [vmem:[%s2 + $0x10] sm:$0xff]
    %v475 = vld [vmem:[%s2 + $0x18] sm:$0xff]
    %v476 = vld [vmem:[%s2 + $0x20] sm:$0xff]
    %v477 = vld [vmem:[%s2 + $0x28] sm:$0xff]
    %v478 = vld [vmem:[%s2 + $0x30] sm:$0xff]
    %v479 = vld [vmem:[%s2 + $0x38] sm:$0xff]
    %v480 = vlaneseq
    %v481 = vshrl.u32 %v480, 7
    %v482 = vsub.s32 0, %v481
    %v483 = vrot.slane %v22, %v482
    %vm484 = vcmask 523264
    %v486 = vsel %vm484, %v464, 0
    %v489 = vsel %vm484, %v469, 0
    %491 = vmatprep.subr.mxu0 0.0
    %492 = vmatpush1.msra.mxu0 %v472
    %493 = vmatprep.subr.mxu0 0.0
    %494 = vmatpush1.msra.mxu0 %v473
    %495 = vmatprep.subr.mxu0 0.0
    %496 = vmatpush1.msra.mxu0 %v474
    %497 = vmatprep.subr.mxu0 0.0
    %498 = vmatpush1.msra.mxu0 %v475
    %499 = vmatprep.subr.mxu0 0.0
    %500 = vmatpush1.msra.mxu0 %v476
    %501 = vmatprep.subr.mxu0 0.0
    %502 = vmatpush1.msra.mxu0 %v477
    %503 = vmatprep.subr.mxu0 0.0
    %504 = vmatpush1.msra.mxu0 %v478
    %505 = vmatprep.subr.mxu0 0.0
    %506 = vmatpush1.msra.mxu0 %v479
    %507 = vmatprep.subr.mxu0 0.0
    %508 = vmatpush1.msra.mxu0 0.0
    %509 = vmatprep.subr.mxu0 0.0
    %510 = vmatpush1.msra.mxu0 0.0
    %511 = vmatprep.subr.mxu0 0.0
    %512 = vmatpush1.msra.mxu0 0.0
    %513 = vmatprep.subr.mxu0 0.0
    %514 = vmatpush1.msra.mxu0 0.0
    %515 = vmatprep.subr.mxu0 0.0
    %516 = vmatpush1.msra.mxu0 0.0
    %517 = vmatprep.subr.mxu0 0.0
    %518 = vmatpush1.msra.mxu0 0.0
    %519 = vmatprep.subr.mxu0 0.0
    %520 = vmatpush1.msra.mxu0 0.0
    %521 = vmatprep.subr.mxu0 0.0
    %522 = vmatpush1.msra.mxu0 0.0
    %523 = vmatprep.subr.mxu0 0.0
    %524 = vmatpush1.msra.mxu0 0.0
    %525 = vmatprep.subr.mxu0 0.0
    %526 = vmatpush1.msra.mxu0 0.0
    %527 = vmatprep.subr.mxu0 0.0
    %528 = vmatpush1.msra.mxu0 0.0
    %529 = vmatprep.subr.mxu0 0.0
    %530 = vmatpush1.msra.mxu0 0.0
    %531 = vmatprep.subr.mxu0 0.0
    %532 = vmatpush1.msra.mxu0 0.0
    %533 = vmatprep.subr.mxu0 0.0
    %534 = vmatpush1.msra.mxu0 0.0
    %535 = vmatprep.subr.mxu0 0.0
    %536 = vmatpush1.msra.mxu0 0.0
    %537 = vmatprep.subr.mxu0 0.0
    %538 = vmatpush1.msra.mxu0 0.0
    %539 = vmatprep.subr.mxu0 0.0
    %540 = vmatpush1.msra.mxu0 0.0
    %541 = vmatprep.subr.mxu0 0.0
    %542 = vmatpush1.msra.mxu0 0.0
    %543 = vmatprep.subr.mxu0 0.0
    %544 = vmatpush1.msra.mxu0 0.0
    %545 = vmatprep.subr.mxu0 0.0
    %546 = vmatpush1.msra.mxu0 0.0
    %547 = vmatprep.subr.mxu0 0.0
    %548 = vmatpush1.msra.mxu0 0.0
    %549 = vmatprep.subr.mxu0 0.0
    %550 = vmatpush1.msra.mxu0 0.0
    %551 = vmatprep.subr.mxu0 0.0
    %552 = vmatpush1.msra.mxu0 0.0
    %553 = vmatprep.subr.mxu0 0.0
    %554 = vmatpush1.msra.mxu0 0.0
    %555 = vmatprep.mubr.f32.mxu0 0.0
    %556 = vmatmul.mubr.f32.gmra.mrb[0].mxu0 %v486
    %v557 = vpop.f32.mrb[0].mxu0
    %v558 = vadd.f32 %v483, %v557
    %v559 = vpop.f32.mrb[0].mxu0
    %560 = vmatprep.mubr.f32.mxu0 0.0
    %561 = vmatmul.mubr.f32.gmra.mrb[0].mxu0 %v489
    %v562 = vpop.f32.mrb[0].mxu0
    %v563 = vadd.f32 %v483, %v562
    %v564 = vpop.f32.mrb[0].mxu0
    %565 = vdwg.mxu0
    %v566 = vmax.f32 %v558, 0.0
    %v567 = vmax.f32 %v563, 0.0
    %vm568 = vcmask 261120
    %v569 = vsel %vm568, %v566, 0.0
    %v570 = vsel %vm568, %v567, 0.0
    %v571 = vadd.f32 %v569, %v570
    %v572 = vrot.slane %v571, 4
    %v573 = vadd.f32 %v571, %v572
    %v574 = vrot.slane %v573, 2
    %v575 = vadd.f32 %v573, %v574
    %v576 = vrot.slane %v575, 1
    %v577 = vadd.f32 %v575, %v576
    %v578 = vrcp.pop 16.0
    %v579 = vmul.f32 %v577, %v578
    %v580 = vld [vmem:[%s3] sm:$0xff]
    %v581 = vld [vmem:[%s3 + $0x8] sm:$0xff]
    %v582 = vld [vmem:[%s3 + $0x10] sm:$0xff]
    %v583 = vld [vmem:[%s3 + $0x18] sm:$0xff]
    %v585 = vsel %vm568, %v579, 0
    %587 = vmatprep.subr.mxu0 0.0
    %588 = vmatpush1.msra.mxu0 %v580
    %589 = vmatprep.subr.mxu0 0.0
    %590 = vmatpush1.msra.mxu0 %v581
    %591 = vmatprep.subr.mxu0 0.0
    %592 = vmatpush1.msra.mxu0 %v582
    %593 = vmatprep.subr.mxu0 0.0
    %594 = vmatpush1.msra.mxu0 %v583
    %595 = vmatprep.subr.mxu0 0.0
    %596 = vmatpush1.msra.mxu0 0.0
    %597 = vmatprep.subr.mxu0 0.0
    %598 = vmatpush1.msra.mxu0 0.0
    %599 = vmatprep.subr.mxu0 0.0
    %600 = vmatpush1.msra.mxu0 0.0
    %601 = vmatprep.subr.mxu0 0.0
    %602 = vmatpush1.msra.mxu0 0.0
    %603 = vmatprep.subr.mxu0 0.0
    %604 = vmatpush1.msra.mxu0 0.0
    %605 = vmatprep.subr.mxu0 0.0
    %606 = vmatpush1.msra.mxu0 0.0
    %607 = vmatprep.subr.mxu0 0.0
    %608 = vmatpush1.msra.mxu0 0.0
    %609 = vmatprep.subr.mxu0 0.0
    %610 = vmatpush1.msra.mxu0 0.0
    %611 = vmatprep.subr.mxu0 0.0
    %612 = vmatpush1.msra.mxu0 0.0
    %613 = vmatprep.subr.mxu0 0.0
    %614 = vmatpush1.msra.mxu0 0.0
    %615 = vmatprep.subr.mxu0 0.0
    %616 = vmatpush1.msra.mxu0 0.0
    %617 = vmatprep.subr.mxu0 0.0
    %618 = vmatpush1.msra.mxu0 0.0
    %619 = vmatprep.subr.mxu0 0.0
    %620 = vmatpush1.msra.mxu0 0.0
    %621 = vmatprep.subr.mxu0 0.0
    %622 = vmatpush1.msra.mxu0 0.0
    %623 = vmatprep.subr.mxu0 0.0
    %624 = vmatpush1.msra.mxu0 0.0
    %625 = vmatprep.subr.mxu0 0.0
    %626 = vmatpush1.msra.mxu0 0.0
    %627 = vmatprep.subr.mxu0 0.0
    %628 = vmatpush1.msra.mxu0 0.0
    %629 = vmatprep.subr.mxu0 0.0
    %630 = vmatpush1.msra.mxu0 0.0
    %631 = vmatprep.subr.mxu0 0.0
    %632 = vmatpush1.msra.mxu0 0.0
    %633 = vmatprep.subr.mxu0 0.0
    %634 = vmatpush1.msra.mxu0 0.0
    %635 = vmatprep.subr.mxu0 0.0
    %636 = vmatpush1.msra.mxu0 0.0
    %637 = vmatprep.subr.mxu0 0.0
    %638 = vmatpush1.msra.mxu0 0.0
    %639 = vmatprep.subr.mxu0 0.0
    %640 = vmatpush1.msra.mxu0 0.0
    %641 = vmatprep.subr.mxu0 0.0
    %642 = vmatpush1.msra.mxu0 0.0
    %643 = vmatprep.subr.mxu0 0.0
    %644 = vmatpush1.msra.mxu0 0.0
    %645 = vmatprep.subr.mxu0 0.0
    %646 = vmatpush1.msra.mxu0 0.0
    %647 = vmatprep.subr.mxu0 0.0
    %648 = vmatpush1.msra.mxu0 0.0
    %649 = vmatprep.subr.mxu0 0.0
    %650 = vmatpush1.msra.mxu0 0.0
    %651 = vmatprep.mubr.f32.mxu0 0.0
    %652 = vmatmul.mubr.f32.gmra.mrb[0].mxu0 %v585
    %v653 = vpop.f32.mrb[0].mxu0
    %v654 = vadd.f32 %v23, %v653
    %v655 = vpop.f32.mrb[0].mxu0
    %656 = vdwg.mxu0
    %vm657 = vcmask 8192
    %658 = vst.msk [vmem:[#allocation2] sm:$0x1] %vm657, %v654
    // Predicated region
    $region22: #{tpu_custom_call.1} parent=1 // pred_check
      _
    $region23: #{tpu_custom_call.1} parent=1 // pred_check_branch
      %660 = sbr.rel (0) target = $region25
    $region24: #{tpu_custom_call.1} parent=1 // pred_region
      %s662 = ssub.s32 16, 16
      %663 = vsyncadd [#allocation3], %s662
      %s665 = sshll.u32 [#allocation2], 4
      %s666 = int_to_ptr.vmem [resolvable:$true] %s665
      %668 = dma.vmem_to_hbm [thread:$0]  %s666, 16, %s5, [#allocation3]
    $region25: #{tpu_custom_call.1} parent=1 // pred_fallthru
      _
    // Predicated region
    $region26: #{tpu_custom_call.1} parent=1 // pred_check
      _
    $region27: #{tpu_custom_call.1} parent=1 // pred_check_branch
      %670 = sbr.rel (0) target = $region29
    $region28: #{tpu_custom_call.1} parent=1 // pred_region
      %671 = dma.done [#allocation3], 16
    $region29: #{tpu_custom_call.1} parent=1 // pred_fallthru
      _
    %672 = vsyncpa [#allocation3], 1

</llo_original>
